<compile_context>
chip_gen: v5e
topology: v5e:2x2
jax: 0.10.0
libtpu: 0.0.40
codegen_flags: <defaults>
</compile_context>

<pallas_src>
import functools

import jax
import jax.numpy as jnp
from jax import lax
from jax.experimental import pallas as pl
from jax.experimental.pallas import tpu as pltpu


# ----------------------------------------------------------------------------
# One-time weight preprocessing (hoisted out of the per-call path).
# ----------------------------------------------------------------------------
def prepare_mha_weights(w_qkv, w_out, head_num, dtype=jnp.bfloat16):
    """Regroup torch Linear weights into per-head fused matrices.

    Row r of the torch QKV projection weight produces output feature
    r = d_idx*(3*H) + kind*H + head (per the 'b t (d k h)' rearrange).

    Returns:
      w_heads [H, 3*d, E] : per-head fused QKV weight (rows ordered Q|K|V),
                            used as x @ W^T.  dk = head_dim/2 (the PyTorch
                            '** 1 / 2' precedence quirk) is pre-folded into Q.
      wout_t  [E, E]      : W_out^T so the single output projection is
                            ctx[T, E] @ wout_t (input dim ordered (h d),
                            matching 'b h t d -> b t (h d)').
    """
    three_e, E = w_qkv.shape
    assert three_e == 3 * E and E % head_num == 0
    d = E // head_num
    dk = (E // head_num) ** 1 / 2          # == head_dim / 2, exactly as PyTorch

    w = w_qkv.reshape(d, 3, head_num, E)   # rows indexed by d*(3H) + k*H + h
    w = jnp.transpose(w, (2, 1, 0, 3))     # -> [H, 3, d, E]
    w = w.at[:, 0].multiply(dk)            # fold dk into Q (free at runtime)
    w_heads = w.reshape(head_num, 3 * d, E).astype(dtype)   # rows: Q|K|V

    wout_t = w_out.T.astype(dtype)         # [E_in, E_out]
    return w_heads, wout_t


# ----------------------------------------------------------------------------
# Pallas kernel: one grid step == one batch element (all heads).
# ----------------------------------------------------------------------------
def _mha_kernel(x_ref, w_ref, wo_ref, o_ref, ctx_ref, *,
                head_num, head_dim, softmax_dtype, approx_recip):
    x = x_ref[...]                                   # [T, E], compute dtype
    cd = x.dtype
    nt = (((1,), (1,)), ((), ()))                    # contract last dims (A @ B^T)
    d = head_dim

    # Static per-head loop: every slice below is static/lane-contiguous and
    # each head's [T, T] temporaries are dead after its ctx slice is written.
    for h in range(head_num):
        w_h = w_ref[h]                               # [3d, E], VMEM-resident
        # Fused Q/K/V projection, emitted directly in the compute dtype
        # (MXU accumulates in f32 internally).
        qkv = lax.dot_general(x, w_h, nt, preferred_element_type=cd)  # [T, 3d]
        q = qkv[:, :d]
        k = qkv[:, d:2 * d]
        v = qkv[:, 2 * d:]

        # energy = (q * dk) @ k^T   (dk already folded into W_q), f32.
        energy = lax.dot_general(q, k, nt,
                                 preferred_element_type=jnp.float32)  # [T, T]

        # Numerically-stable softmax; exponentials in softmax_dtype
        # (bf16 on v6e/v7x, f32 on v5e / f32 compute), row sums in f32.
        m = jnp.max(energy, axis=-1, keepdims=True)
        p = jnp.exp((energy - m).astype(softmax_dtype))                # [T, T]
        denom = jnp.sum(p, axis=-1, keepdims=True, dtype=jnp.float32)  # [T, 1]
        inv = pl.reciprocal(denom, approx=approx_recip)                # EUP

        # Unnormalized context, then scale the small [T, d] result.
        ctx = jnp.dot(p.astype(cd), v,
                      preferred_element_type=jnp.float32) * inv        # [T, d]

        # Static lane-slice write of this head's context ('b t (h d)' order).
        ctx_ref[:, h * d:(h + 1) * d] = ctx.astype(ctx_ref.dtype)

    # Single full-K output projection: ctx[T, E] @ W_out^T[E, E].
    o_ref[...] = jnp.dot(ctx_ref[...], wo_ref[...],
                         preferred_element_type=jnp.float32).astype(o_ref.dtype)


# ----------------------------------------------------------------------------
# Helpers for generation-aware knobs.
# ----------------------------------------------------------------------------
def _vmem_capacity_bytes():
    try:
        info = pltpu.get_tpu_info()
        cap = getattr(info, "vmem_capacity_bytes", None)
        if cap:
            return int(cap)
    except Exception:
        pass
    return 64 << 20   # conservative: v7x per-TensorCore VMEM


def _default_softmax_dtype(compute_dtype):
    if jnp.dtype(compute_dtype) == jnp.dtype(jnp.float32):
        return jnp.float32
    try:
        kind = jax.devices()[0].device_kind.lower()
    except Exception:
        kind = ""
    if "v5" in kind:          # v5e/v5p: no bf16 VPU/EUP -> keep softmax in f32
        return jnp.float32
    return jnp.bfloat16       # v6e/v7x: packed bf16 exp path


# ----------------------------------------------------------------------------
# Wrapper: pallas_call with a (batch,) grid and VMEM-resident weights.
# ----------------------------------------------------------------------------
def mha_forward(x, w_heads, wout_t, head_num, *,
                compute_dtype=jnp.bfloat16, approx_reciprocal=True,
                softmax_dtype=None):
    """x: [B, T, E]; w_heads: [H, 3*d, E]; wout_t: [E, E]."""
    B, T, E = x.shape
    H, three_d, E2 = w_heads.shape
    d = E // head_num
    assert H == head_num and three_d == 3 * d and E2 == E and d * H == E
    assert wout_t.shape == (E, E)
    out_dtype = x.dtype

    if softmax_dtype is None:
        softmax_dtype = _default_softmax_dtype(compute_dtype)

    x_c = x.astype(compute_dtype)
    w_c = w_heads.astype(compute_dtype)
    wo_c = wout_t.astype(compute_dtype)

    kernel = functools.partial(_mha_kernel, head_num=head_num, head_dim=d,
                               softmax_dtype=softmax_dtype,
                               approx_recip=approx_reciprocal)

    # Generation-aware VMEM budget: size to the working set, cap at ~0.8x of
    # the chip's physical VMEM (128 MiB v5e/v6e, 64 MiB per-TC v7x).
    cbytes = jnp.dtype(compute_dtype).itemsize
    obytes = jnp.dtype(out_dtype).itemsize
    sbytes = jnp.dtype(softmax_dtype).itemsize
    weight_bytes = 2 * (3 * E * E + E * E) * cbytes        # resident (x2 slack)
    block_bytes = 2 * T * E * (cbytes + obytes)             # dbl-buffered x/out
    scratch_bytes = T * E * cbytes                          # ctx scratch
    temp_bytes = (T * T * (4 + sbytes)                      # energy + p
                  + T * (4 * d) * cbytes + T * d * 4        # qkv + ctx
                  + 4 * T * 4)                              # m / denom / inv
    working_set = weight_bytes + block_bytes + scratch_bytes + temp_bytes
    cap = _vmem_capacity_bytes()
    vmem_limit = int(min(max(2 * working_set, 32 << 20), int(0.8 * cap)))

    return pl.pallas_call(
        kernel,
        out_shape=jax.ShapeDtypeStruct((B, T, E), out_dtype),
        grid_spec=pltpu.PrefetchScalarGridSpec(
            num_scalar_prefetch=0,
            grid=(B,),
            in_specs=[
                # x: one [T, E] block per batch element.
                pl.BlockSpec((None, T, E), lambda b: (b, 0, 0)),
                # Fused per-head QKV weights, constant index -> DMA'd once.
                pl.BlockSpec((head_num, 3 * d, E), lambda b: (0, 0, 0)),
                # Full W_out^T, constant index -> DMA'd once.
                pl.BlockSpec((E, E), lambda b: (0, 0)),
            ],
            out_specs=pl.BlockSpec((None, T, E), lambda b: (b, 0, 0)),
            # Context scratch holding all heads' outputs in (h d) lane order.
            scratch_shapes=[pltpu.VMEM((T, E), compute_dtype)],
        ),
        compiler_params=pltpu.CompilerParams(
            dimension_semantics=("parallel",),
            vmem_limit_bytes=vmem_limit,
        ),
    )(x_c, w_c, wo_c)


def multi_head_attention_pallas(x, w_qkv, w_out, head_num, mask=None, *,
                                compute_dtype=jnp.bfloat16,
                                approx_reciprocal=True):
    """Convenience wrapper.  In steady state call prepare_mha_weights() once
    (e.g. at parameter-init time) and reuse the prepared weights.

    Precision contract: the default path runs matmul operands and softmax
    exponentials in bf16 with f32 accumulation, so outputs differ from a pure
    f32 forward at ~1e-2 level.  Pass compute_dtype=jnp.float32 (and
    approx_reciprocal=False) for a bit-faithful-ish f32 path.
    """
    # TODO(synk): attention mask (masked_fill) not implemented.
    assert mask is None, "mask path not implemented in the Pallas kernel"
    w_heads, wout_t = prepare_mha_weights(w_qkv, w_out, head_num,
                                          dtype=compute_dtype)
    return mha_forward(x, w_heads, wout_t, head_num,
                       compute_dtype=compute_dtype,
                       approx_reciprocal=approx_reciprocal)


# ----------------------------------------------------------------------------
# Pure-JAX reference mirroring the torch forward (including the rearrange
# factorization and the dk = head_dim/2 scaling quirk).
# ----------------------------------------------------------------------------
def _torch_semantics_ref(x, w_qkv, w_out, head_num):
    hp = lax.Precision.HIGHEST
    B, T, E = x.shape
    d = E // head_num
    qkv = jnp.einsum('bte,ce->btc', x, w_qkv, precision=hp)   # Linear, no bias
    qkv = qkv.reshape(B, T, d, 3, head_num)                   # 'b t (d k h)'
    qkv = jnp.transpose(qkv, (3, 0, 4, 1, 2))                 # 'k b h t d'
    q, k, v = qkv[0], qkv[1], qkv[2]
    dk = (E // head_num) ** 1 / 2                              # head_dim / 2
    energy = jnp.einsum('bhid,bhjd->bhij', q, k, precision=hp) * dk
    attn = jax.nn.softmax(energy, axis=-1)
    ctx = jnp.einsum('bhij,bhjd->bhid', attn, v, precision=hp)
    ctx = jnp.transpose(ctx, (0, 2, 1, 3)).reshape(B, T, E)   # 'b h t d -> b t (h d)'
    return jnp.einsum('bte,oe->bto', ctx, w_out, precision=hp)


if __name__ == "__main__":
    # Correctness-only toy shapes (E < 128 => masked partial stores; real
    # configs should use E, d multiples of 128 for lane-dense layouts).
    B, T, E, H = 2, 8, 32, 4

    key = jax.random.PRNGKey(0)
    kx, kq, ko = jax.random.split(key, 3)

    bound = 1.0 / (E ** 0.5)
    x = jax.random.normal(kx, (B, T, E), dtype=jnp.float32)
    w_qkv = jax.random.uniform(kq, (3 * E, E), jnp.float32, -bound, bound)
    w_out = jax.random.uniform(ko, (E, E), jnp.float32, -bound, bound)

    # bf16-representable test data so the tight f32 check is independent of
    # how many MXU passes the compiler chooses for f32 matmuls.
    x = x.astype(jnp.bfloat16).astype(jnp.float32)
    w_qkv = w_qkv.astype(jnp.bfloat16).astype(jnp.float32)
    w_out = w_out.astype(jnp.bfloat16).astype(jnp.float32)

    ref = _torch_semantics_ref(x, w_qkv, w_out, H)

    # 1) Tight correctness check: f32 compute path, exact reciprocal, f32 exp.
    wq32, wo32 = prepare_mha_weights(w_qkv, w_out, H, dtype=jnp.float32)
    out_f32 = mha_forward(x, wq32, wo32, H,
                          compute_dtype=jnp.float32, approx_reciprocal=False)
    out_f32 = jax.block_until_ready(out_f32)
    assert out_f32.shape == (B, T, E)
    assert jnp.allclose(out_f32, ref, atol=5e-4, rtol=5e-4), \
        "f32 kernel mismatch vs reference"

    # 2) Default fast path: bf16 MXU operands, chip-dependent softmax dtype,
    #    f32 accumulation, EUP reciprocal.
    out_bf16 = multi_head_attention_pallas(x, w_qkv, w_out, H,
                                           compute_dtype=jnp.bfloat16,
                                           approx_reciprocal=True)
    out_bf16 = jax.block_until_ready(out_bf16)
    assert out_bf16.shape == (B, T, E)
    assert jnp.allclose(out_bf16.astype(jnp.float32), ref, atol=1e-1, rtol=1e-1), \
        "bf16 kernel mismatch vs reference"

    print("KERNEL_OK")
</pallas_src>

<mosaic_0001>
module attributes {stable_mosaic.version = 11 : i64} {
  func.func @_mha_kernel(%arg0: i32, %arg1: memref<1x8x32xf32, #tpu.memory_space<vmem>>, %arg2: memref<4x24x32xf32, #tpu.memory_space<vmem>>, %arg3: memref<32x32xf32, #tpu.memory_space<vmem>>, %arg4: memref<1x8x32xf32, #tpu.memory_space<vmem>>, %arg5: memref<8x32xf32, #tpu.memory_space<vmem>>) attributes {dimension_semantics = [#tpu.dimension_semantics<parallel>], iteration_bounds = array<i64: 2>, scalar_prefetch = 0 : i64, scratch_operands = 1 : i64, tpu.core_type = #tpu.core_type<tc>, window_params = [{transform_indices = @transform_0, window_bounds = array<i64: 1, 8, 32>}, {pipeline_mode = #tpu.pipeline_mode<synchronous>, transform_indices = @transform_1, window_bounds = array<i64: 4, 24, 32>}, {pipeline_mode = #tpu.pipeline_mode<synchronous>, transform_indices = @transform_2, window_bounds = array<i64: 32, 32>}, {transform_indices = @transform_3, window_bounds = array<i64: 1, 8, 32>}]} {
    %c0 = arith.constant 0 : index
    %c0_0 = arith.constant 0 : index
    %c0_1 = arith.constant 0 : index
    %0 = vector.load %arg1[%c0, %c0_0, %c0_1] : memref<1x8x32xf32, #tpu.memory_space<vmem>>, vector<1x8x32xf32>
    %1 = vector.shape_cast %0 : vector<1x8x32xf32> to vector<8x32xf32>
    %c0_2 = arith.constant 0 : index
    %c0_3 = arith.constant 0 : index
    %c0_4 = arith.constant 0 : index
    %2 = vector.load %arg2[%c0_2, %c0_3, %c0_4] : memref<4x24x32xf32, #tpu.memory_space<vmem>>, vector<1x24x32xf32>
    %3 = vector.shape_cast %2 : vector<1x24x32xf32> to vector<24x32xf32>
    %cst = arith.constant dense<0.000000e+00> : vector<8x24xf32>
    %4 = tpu.matmul %1, %3, %cst {dimension_numbers = #tpu.dot_dimension_numbers<[1], [1], [0], [0], [0, 0, 1, 0], [], []>} : vector<8x32xf32>, vector<24x32xf32>, vector<8x24xf32> -> vector<8x24xf32>
    %5 = vector.extract_strided_slice %4 {offsets = [0, 0], sizes = [8, 8], strides = [1, 1]} : vector<8x24xf32> to vector<8x8xf32>
    %6 = vector.extract_strided_slice %4 {offsets = [0, 8], sizes = [8, 8], strides = [1, 1]} : vector<8x24xf32> to vector<8x8xf32>
    %7 = vector.extract_strided_slice %4 {offsets = [0, 16], sizes = [8, 8], strides = [1, 1]} : vector<8x24xf32> to vector<8x8xf32>
    %cst_5 = arith.constant dense<0.000000e+00> : vector<8x8xf32>
    %8 = tpu.matmul %5, %6, %cst_5 {dimension_numbers = #tpu.dot_dimension_numbers<[1], [1], [0], [0], [0, 0, 1, 0], [], []>} : vector<8x8xf32>, vector<8x8xf32>, vector<8x8xf32> -> vector<8x8xf32>
    %cst_6 = arith.constant dense<0xFF800000> : vector<8xf32>
    %9 = vector.multi_reduction <maximumf>, %8, %cst_6 [1] : vector<8x8xf32> to vector<8xf32>
    %10 = vector.shape_cast %9 : vector<8xf32> to vector<8x1xf32>
    %11 = vector.broadcast %10 : vector<8x1xf32> to vector<8x8xf32>
    %12 = arith.subf %8, %11 : vector<8x8xf32>
    %13 = math.exp %12 : vector<8x8xf32>
    %cst_7 = arith.constant dense<0.000000e+00> : vector<8xf32>
    %14 = vector.multi_reduction <add>, %13, %cst_7 [1] : vector<8x8xf32> to vector<8xf32>
    %15 = vector.shape_cast %14 : vector<8xf32> to vector<8x1xf32>
    %16 = tpu.reciprocal %15 : vector<8x1xf32> -> vector<8x1xf32>
    %cst_8 = arith.constant dense<0.000000e+00> : vector<8x8xf32>
    %17 = tpu.matmul %13, %7, %cst_8 {dimension_numbers = #tpu.dot_dimension_numbers<[1], [0], [0], [1], [0, 0, 1, 1], [], []>} : vector<8x8xf32>, vector<8x8xf32>, vector<8x8xf32> -> vector<8x8xf32>
    %18 = vector.broadcast %16 : vector<8x1xf32> to vector<8x8xf32>
    %19 = arith.mulf %17, %18 : vector<8x8xf32>
    %c0_9 = arith.constant 0 : index
    %c0_10 = arith.constant 0 : index
    %20 = vector.load %arg5[%c0_9, %c0_10] : memref<8x32xf32, #tpu.memory_space<vmem>>, vector<8x8xf32>
    tpu.vector_store %arg5[%c0_9, %c0_10], %19 {strides = array<i32>} : memref<8x32xf32, #tpu.memory_space<vmem>>, vector<8x8xf32>,
    %c1 = arith.constant 1 : index
    %c0_11 = arith.constant 0 : index
    %c0_12 = arith.constant 0 : index
    %21 = vector.load %arg2[%c1, %c0_11, %c0_12] : memref<4x24x32xf32, #tpu.memory_space<vmem>>, vector<1x24x32xf32>
    %22 = vector.shape_cast %21 : vector<1x24x32xf32> to vector<24x32xf32>
    %cst_13 = arith.constant dense<0.000000e+00> : vector<8x24xf32>
    %23 = tpu.matmul %1, %22, %cst_13 {dimension_numbers = #tpu.dot_dimension_numbers<[1], [1], [0], [0], [0, 0, 1, 0], [], []>} : vector<8x32xf32>, vector<24x32xf32>, vector<8x24xf32> -> vector<8x24xf32>
    %24 = vector.extract_strided_slice %23 {offsets = [0, 0], sizes = [8, 8], strides = [1, 1]} : vector<8x24xf32> to vector<8x8xf32>
    %25 = vector.extract_strided_slice %23 {offsets = [0, 8], sizes = [8, 8], strides = [1, 1]} : vector<8x24xf32> to vector<8x8xf32>
    %26 = vector.extract_strided_slice %23 {offsets = [0, 16], sizes = [8, 8], strides = [1, 1]} : vector<8x24xf32> to vector<8x8xf32>
    %cst_14 = arith.constant dense<0.000000e+00> : vector<8x8xf32>
    %27 = tpu.matmul %24, %25, %cst_14 {dimension_numbers = #tpu.dot_dimension_numbers<[1], [1], [0], [0], [0, 0, 1, 0], [], []>} : vector<8x8xf32>, vector<8x8xf32>, vector<8x8xf32> -> vector<8x8xf32>
    %cst_15 = arith.constant dense<0xFF800000> : vector<8xf32>
    %28 = vector.multi_reduction <maximumf>, %27, %cst_15 [1] : vector<8x8xf32> to vector<8xf32>
    %29 = vector.shape_cast %28 : vector<8xf32> to vector<8x1xf32>
    %30 = vector.broadcast %29 : vector<8x1xf32> to vector<8x8xf32>
    %31 = arith.subf %27, %30 : vector<8x8xf32>
    %32 = math.exp %31 : vector<8x8xf32>
    %cst_16 = arith.constant dense<0.000000e+00> : vector<8xf32>
    %33 = vector.multi_reduction <add>, %32, %cst_16 [1] : vector<8x8xf32> to vector<8xf32>
    %34 = vector.shape_cast %33 : vector<8xf32> to vector<8x1xf32>
    %35 = tpu.reciprocal %34 : vector<8x1xf32> -> vector<8x1xf32>
    %cst_17 = arith.constant dense<0.000000e+00> : vector<8x8xf32>
    %36 = tpu.matmul %32, %26, %cst_17 {dimension_numbers = #tpu.dot_dimension_numbers<[1], [0], [0], [1], [0, 0, 1, 1], [], []>} : vector<8x8xf32>, vector<8x8xf32>, vector<8x8xf32> -> vector<8x8xf32>
    %37 = vector.broadcast %35 : vector<8x1xf32> to vector<8x8xf32>
    %38 = arith.mulf %36, %37 : vector<8x8xf32>
    %c0_18 = arith.constant 0 : index
    %c8 = arith.constant 8 : index
    %39 = vector.load %arg5[%c0_18, %c8] : memref<8x32xf32, #tpu.memory_space<vmem>>, vector<8x8xf32>
    tpu.vector_store %arg5[%c0_18, %c8], %38 {strides = array<i32>} : memref<8x32xf32, #tpu.memory_space<vmem>>, vector<8x8xf32>,
    %c2 = arith.constant 2 : index
    %c0_19 = arith.constant 0 : index
    %c0_20 = arith.constant 0 : index
    %40 = vector.load %arg2[%c2, %c0_19, %c0_20] : memref<4x24x32xf32, #tpu.memory_space<vmem>>, vector<1x24x32xf32>
    %41 = vector.shape_cast %40 : vector<1x24x32xf32> to vector<24x32xf32>
    %cst_21 = arith.constant dense<0.000000e+00> : vector<8x24xf32>
    %42 = tpu.matmul %1, %41, %cst_21 {dimension_numbers = #tpu.dot_dimension_numbers<[1], [1], [0], [0], [0, 0, 1, 0], [], []>} : vector<8x32xf32>, vector<24x32xf32>, vector<8x24xf32> -> vector<8x24xf32>
    %43 = vector.extract_strided_slice %42 {offsets = [0, 0], sizes = [8, 8], strides = [1, 1]} : vector<8x24xf32> to vector<8x8xf32>
    %44 = vector.extract_strided_slice %42 {offsets = [0, 8], sizes = [8, 8], strides = [1, 1]} : vector<8x24xf32> to vector<8x8xf32>
    %45 = vector.extract_strided_slice %42 {offsets = [0, 16], sizes = [8, 8], strides = [1, 1]} : vector<8x24xf32> to vector<8x8xf32>
    %cst_22 = arith.constant dense<0.000000e+00> : vector<8x8xf32>
    %46 = tpu.matmul %43, %44, %cst_22 {dimension_numbers = #tpu.dot_dimension_numbers<[1], [1], [0], [0], [0, 0, 1, 0], [], []>} : vector<8x8xf32>, vector<8x8xf32>, vector<8x8xf32> -> vector<8x8xf32>
    %cst_23 = arith.constant dense<0xFF800000> : vector<8xf32>
    %47 = vector.multi_reduction <maximumf>, %46, %cst_23 [1] : vector<8x8xf32> to vector<8xf32>
    %48 = vector.shape_cast %47 : vector<8xf32> to vector<8x1xf32>
    %49 = vector.broadcast %48 : vector<8x1xf32> to vector<8x8xf32>
    %50 = arith.subf %46, %49 : vector<8x8xf32>
    %51 = math.exp %50 : vector<8x8xf32>
    %cst_24 = arith.constant dense<0.000000e+00> : vector<8xf32>
    %52 = vector.multi_reduction <add>, %51, %cst_24 [1] : vector<8x8xf32> to vector<8xf32>
    %53 = vector.shape_cast %52 : vector<8xf32> to vector<8x1xf32>
    %54 = tpu.reciprocal %53 : vector<8x1xf32> -> vector<8x1xf32>
    %cst_25 = arith.constant dense<0.000000e+00> : vector<8x8xf32>
    %55 = tpu.matmul %51, %45, %cst_25 {dimension_numbers = #tpu.dot_dimension_numbers<[1], [0], [0], [1], [0, 0, 1, 1], [], []>} : vector<8x8xf32>, vector<8x8xf32>, vector<8x8xf32> -> vector<8x8xf32>
    %56 = vector.broadcast %54 : vector<8x1xf32> to vector<8x8xf32>
    %57 = arith.mulf %55, %56 : vector<8x8xf32>
    %c0_26 = arith.constant 0 : index
    %c16 = arith.constant 16 : index
    %58 = vector.load %arg5[%c0_26, %c16] : memref<8x32xf32, #tpu.memory_space<vmem>>, vector<8x8xf32>
    tpu.vector_store %arg5[%c0_26, %c16], %57 {strides = array<i32>} : memref<8x32xf32, #tpu.memory_space<vmem>>, vector<8x8xf32>,
    %c3 = arith.constant 3 : index
    %c0_27 = arith.constant 0 : index
    %c0_28 = arith.constant 0 : index
    %59 = vector.load %arg2[%c3, %c0_27, %c0_28] : memref<4x24x32xf32, #tpu.memory_space<vmem>>, vector<1x24x32xf32>
    %60 = vector.shape_cast %59 : vector<1x24x32xf32> to vector<24x32xf32>
    %cst_29 = arith.constant dense<0.000000e+00> : vector<8x24xf32>
    %61 = tpu.matmul %1, %60, %cst_29 {dimension_numbers = #tpu.dot_dimension_numbers<[1], [1], [0], [0], [0, 0, 1, 0], [], []>} : vector<8x32xf32>, vector<24x32xf32>, vector<8x24xf32> -> vector<8x24xf32>
    %62 = vector.extract_strided_slice %61 {offsets = [0, 0], sizes = [8, 8], strides = [1, 1]} : vector<8x24xf32> to vector<8x8xf32>
    %63 = vector.extract_strided_slice %61 {offsets = [0, 8], sizes = [8, 8], strides = [1, 1]} : vector<8x24xf32> to vector<8x8xf32>
    %64 = vector.extract_strided_slice %61 {offsets = [0, 16], sizes = [8, 8], strides = [1, 1]} : vector<8x24xf32> to vector<8x8xf32>
    %cst_30 = arith.constant dense<0.000000e+00> : vector<8x8xf32>
    %65 = tpu.matmul %62, %63, %cst_30 {dimension_numbers = #tpu.dot_dimension_numbers<[1], [1], [0], [0], [0, 0, 1, 0], [], []>} : vector<8x8xf32>, vector<8x8xf32>, vector<8x8xf32> -> vector<8x8xf32>
    %cst_31 = arith.constant dense<0xFF800000> : vector<8xf32>
    %66 = vector.multi_reduction <maximumf>, %65, %cst_31 [1] : vector<8x8xf32> to vector<8xf32>
    %67 = vector.shape_cast %66 : vector<8xf32> to vector<8x1xf32>
    %68 = vector.broadcast %67 : vector<8x1xf32> to vector<8x8xf32>
    %69 = arith.subf %65, %68 : vector<8x8xf32>
    %70 = math.exp %69 : vector<8x8xf32>
    %cst_32 = arith.constant dense<0.000000e+00> : vector<8xf32>
    %71 = vector.multi_reduction <add>, %70, %cst_32 [1] : vector<8x8xf32> to vector<8xf32>
    %72 = vector.shape_cast %71 : vector<8xf32> to vector<8x1xf32>
    %73 = tpu.reciprocal %72 : vector<8x1xf32> -> vector<8x1xf32>
    %cst_33 = arith.constant dense<0.000000e+00> : vector<8x8xf32>
    %74 = tpu.matmul %70, %64, %cst_33 {dimension_numbers = #tpu.dot_dimension_numbers<[1], [0], [0], [1], [0, 0, 1, 1], [], []>} : vector<8x8xf32>, vector<8x8xf32>, vector<8x8xf32> -> vector<8x8xf32>
    %75 = vector.broadcast %73 : vector<8x1xf32> to vector<8x8xf32>
    %76 = arith.mulf %74, %75 : vector<8x8xf32>
    %c0_34 = arith.constant 0 : index
    %c24 = arith.constant 24 : index
    %77 = vector.load %arg5[%c0_34, %c24] : memref<8x32xf32, #tpu.memory_space<vmem>>, vector<8x8xf32>
    tpu.vector_store %arg5[%c0_34, %c24], %76 {strides = array<i32>} : memref<8x32xf32, #tpu.memory_space<vmem>>, vector<8x8xf32>,
    %c0_35 = arith.constant 0 : index
    %c0_36 = arith.constant 0 : index
    %78 = vector.load %arg5[%c0_35, %c0_36] : memref<8x32xf32, #tpu.memory_space<vmem>>, vector<8x32xf32>
    %c0_37 = arith.constant 0 : index
    %c0_38 = arith.constant 0 : index
    %79 = vector.load %arg3[%c0_37, %c0_38] : memref<32x32xf32, #tpu.memory_space<vmem>>, vector<32x32xf32>
    %cst_39 = arith.constant dense<0.000000e+00> : vector<8x32xf32>
    %80 = tpu.matmul %78, %79, %cst_39 {dimension_numbers = #tpu.dot_dimension_numbers<[1], [0], [0], [1], [0, 0, 1, 1], [], []>} : vector<8x32xf32>, vector<32x32xf32>, vector<8x32xf32> -> vector<8x32xf32>
    %c0_40 = arith.constant 0 : index
    %c0_41 = arith.constant 0 : index
    %c0_42 = arith.constant 0 : index
    %81 = vector.load %arg4[%c0_40, %c0_41, %c0_42] : memref<1x8x32xf32, #tpu.memory_space<vmem>>, vector<1x8x32xf32>
    %82 = vector.shape_cast %81 : vector<1x8x32xf32> to vector<8x32xf32>
    %83 = vector.shape_cast %80 : vector<8x32xf32> to vector<1x8x32xf32>
    tpu.vector_store %arg4[%c0_40, %c0_41, %c0_42], %83 {strides = array<i32>} : memref<1x8x32xf32, #tpu.memory_space<vmem>>, vector<1x8x32xf32>,
    return
  }
  func.func @transform_0(%arg0: i32) -> (i32, i32, i32) {
    %c0_i32 = arith.constant 0 : i32
    %c0_i32_0 = arith.constant 0 : i32
    %c0_i32_1 = arith.constant 0 : i32
    return %arg0, %c0_i32, %c0_i32_0 : i32, i32, i32
  }
  func.func @transform_1(%arg0: i32) -> (i32, i32, i32) {
    %c0_i32 = arith.constant 0 : i32
    %c0_i32_0 = arith.constant 0 : i32
    %c0_i32_1 = arith.constant 0 : i32
    %c0_i32_2 = arith.constant 0 : i32
    return %c0_i32, %c0_i32_0, %c0_i32_1 : i32, i32, i32
  }
  func.func @transform_2(%arg0: i32) -> (i32, i32) {
    %c0_i32 = arith.constant 0 : i32
    %c0_i32_0 = arith.constant 0 : i32
    %c0_i32_1 = arith.constant 0 : i32
    return %c0_i32, %c0_i32_0 : i32, i32
  }
  func.func @transform_3(%arg0: i32) -> (i32, i32, i32) {
    %c0_i32 = arith.constant 0 : i32
    %c0_i32_0 = arith.constant 0 : i32
    %c0_i32_1 = arith.constant 0 : i32
    return %arg0, %c0_i32, %c0_i32_0 : i32, i32, i32
  }
}

</mosaic_0001>

<llo_original>
// kernel: tpu_custom_call.1
$region0: #{tpu_custom_call.1}
  #allocation0 [shape = 'u32[]', space=smem, size = 0x4, offset = 0x4, fixed_abs, tag = 'smem constant byte address 0x4 - core index']
  #allocation1 [shape = 'u32[72,128]{1,0:T(1,128)}', space=vmem, size = 0x9000, scoped, tag = 'internal scratch']
  #allocation2 [shape = 'f32[8,32]{1,0:T(8,128)}', space=vmem, size = 0x1000, scoped, tag = 'scratch operand']
  %s0 = inlined_call_operand.hbm [shape: f32[2,8,32], index: 0, kind: input, shape index: {}]
  %s1 = inlined_call_operand.hbm [shape: f32[4,24,32], index: 1, kind: input, shape index: {}]
  %s2 = inlined_call_operand.hbm [shape: f32[32,32], index: 2, kind: input, shape index: {}]
  %s3 = inlined_call_operand.hbm [shape: f32[2,8,32], index: 3, kind: output, shape index: {}]
  %s4 = sld [smem:[#allocation0]]
  $region57: #{tpu_custom_call.1} parent=0
    _
  %s6 = ssub.s32 1, %s4
  %s7 = scalar_select 0, %s6, %s4
  $region1: #{tpu_custom_call.1} parent=0
    #allocation3 [shape = 'u8[8192]{0}', space=vmem, size = 0x2000, scoped, tag = 'input window, operand 0']
    #allocation4 [shape = 's32[2]{0}', space=sflag, size = 0x8, scoped, tag = 'scoped memory for tpu_custom_call.1']
    #allocation5 [shape = 's32[2]{0}', space=sflag, size = 0x8, scoped, tag = 'scoped memory for tpu_custom_call.1']
    #allocation6 [shape = 'u8[49152]{0}', space=vmem, size = 0xc000, scoped, tag = 'input window, operand 1, single buffered']
    #allocation7 [shape = 's32[1]{0}', space=sflag, size = 0x4, scoped, tag = 'scoped memory for tpu_custom_call.1']
    #allocation8 [shape = 'u8[16384]{0}', space=vmem, size = 0x4000, scoped, tag = 'input window, operand 2, single buffered']
    #allocation9 [shape = 'u8[8192]{0}', space=vmem, size = 0x2000, scoped, tag = 'output window, operand 0']
    %8 = vsyncpa [#allocation4], 0
    %s9 = scalar_lea.sflag [#allocation4], 1
    %10 = vsyncpa %s9, 0
    %11 = vsyncpa [#allocation7], 0
    %12 = vsyncpa [#allocation5], 0
    %s13 = scalar_lea.sflag [#allocation5], 1
    %14 = vsyncpa %s13, 0
    loop: start=0, step=1, limit=4
    $region2: #{tpu_custom_call.1} parent=1 // loop_pre_header
      _
    $region3: #{tpu_custom_call.1} parent=1 // loop_header
      %s16 = sphi 0, %s20
      %p17 = scmp.ge.s32.totalorder %s16, 4
      %s26 = sphi 0, %s28
      %s29 = sphi 0, %s26
      %s30 = sphi 0, %s29
      %s46 = sphi 0, %s30
      %s50 = sphi 0, %s50
      %s52 = sphi 0, %s50
      %s53 = sphi 0, %s52
      %s67 = sphi 0, %s53
      %s71 = sphi 0, %s71
      %s73 = sphi 0, %s71
      %s74 = sphi 0, %s73
      %s88 = sphi 0, %s74
      %s94 = sphi 0, %s96
      %s97 = sphi 0, %s94
      %s98 = sphi 0, %s97
      %s114 = sphi 0, %s98
    $region4: #{tpu_custom_call.1} parent=1 // loop_header_branch
      %19 = sbr.rel (%p17) target = $region8
    $region5: #{tpu_custom_call.1} parent=1 // loop_body
      %s21 = ssub.s32 %s16, 1
      %s22 = ssub.s32 %s16, 2
      %s23 = sadd.s32 %s16, 1
      %s24 = ssub.s32 %s16, %s23
      %p25 = scmp.eq.s32.totalorder %s24, 0
      %s27 = sadd.s32 %s26, 1
      %s28 = scalar_select %p25, %s26, %s27
      %p31 = pneg %p25
      %p32 = scmp.eq.s32.totalorder %s16, 1
      %p33 = por %p31, %p32
      %p34 = scmp.ne.s32.totalorder %s26, %s29
      %p35 = scmp.eq.s32.totalorder %s16, 0
      %p36 = por %p34, %p35
      %p37 = scmp.ne.s32.totalorder %s26, %s29
      %p38 = scmp.eq.s32.totalorder %s21, 1
      %p39 = por %p37, %p38
      %p40 = scmp.ne.s32.totalorder %s29, %s30
      %p41 = scmp.eq.s32.totalorder %s21, 0
      %p42 = por %p40, %p41
      %p43 = scmp.ne.s32.totalorder %s29, %s30
      %p44 = scmp.eq.s32.totalorder %s22, 1
      %p45 = por %p43, %p44
      %p47 = scmp.ne.s32.totalorder %s30, %s46
      %p48 = scmp.eq.s32.totalorder %s22, 0
      %p49 = por %p47, %p48
      %s51 = sadd.s32 %s50, 1
      %p54 = scmp.eq.s32.totalorder %s16, 1
      %p55 = scmp.ne.s32.totalorder %s50, %s52
      %p56 = scmp.eq.s32.totalorder %s16, 0
      %p57 = por %p55, %p56
      %p58 = scmp.ne.s32.totalorder %s50, %s52
      %p59 = scmp.eq.s32.totalorder %s21, 1
      %p60 = por %p58, %p59
      %p61 = scmp.ne.s32.totalorder %s52, %s53
      %p62 = scmp.eq.s32.totalorder %s21, 0
      %p63 = por %p61, %p62
      %p64 = scmp.ne.s32.totalorder %s52, %s53
      %p65 = scmp.eq.s32.totalorder %s22, 1
      %p66 = por %p64, %p65
      %p68 = scmp.ne.s32.totalorder %s53, %s67
      %p69 = scmp.eq.s32.totalorder %s22, 0
      %p70 = por %p68, %p69
      %s72 = sadd.s32 %s71, 1
      %p75 = scmp.eq.s32.totalorder %s16, 1
      %p76 = scmp.ne.s32.totalorder %s71, %s73
      %p77 = scmp.eq.s32.totalorder %s16, 0
      %p78 = por %p76, %p77
      %p79 = scmp.ne.s32.totalorder %s71, %s73
      %p80 = scmp.eq.s32.totalorder %s21, 1
      %p81 = por %p79, %p80
      %p82 = scmp.ne.s32.totalorder %s73, %s74
      %p83 = scmp.eq.s32.totalorder %s21, 0
      %p84 = por %p82, %p83
      %p85 = scmp.ne.s32.totalorder %s73, %s74
      %p86 = scmp.eq.s32.totalorder %s22, 1
      %p87 = por %p85, %p86
      %p89 = scmp.ne.s32.totalorder %s74, %s88
      %p90 = scmp.eq.s32.totalorder %s22, 0
      %p91 = por %p89, %p90
      %s92 = ssub.s32 %s16, %s23
      %p93 = scmp.eq.s32.totalorder %s92, 0
      %s95 = sadd.s32 %s94, 1
      %s96 = scalar_select %p93, %s94, %s95
      %p99 = pneg %p93
      %p100 = scmp.eq.s32.totalorder %s16, 1
      %p101 = por %p99, %p100
      %p102 = scmp.ne.s32.totalorder %s94, %s97
      %p103 = scmp.eq.s32.totalorder %s16, 0
      %p104 = por %p102, %p103
      %p105 = scmp.ne.s32.totalorder %s94, %s97
      %p106 = scmp.eq.s32.totalorder %s21, 1
      %p107 = por %p105, %p106
      %p108 = scmp.ne.s32.totalorder %s97, %s98
      %p109 = scmp.eq.s32.totalorder %s21, 0
      %p110 = por %p108, %p109
      %p111 = scmp.ne.s32.totalorder %s97, %s98
      %p112 = scmp.eq.s32.totalorder %s22, 1
      %p113 = por %p111, %p112
      %p115 = scmp.ne.s32.totalorder %s98, %s114
      %p116 = scmp.eq.s32.totalorder %s22, 0
      %p117 = por %p115, %p116
      %p118 = scmp.le.s32.totalorder 1, %s16
      %p119 = scmp.lt.s32.totalorder %s16, 3
      %p120 = pnand %p118, %p119
      %p121 = pneg %p120
      // Predicated region
      $region9: #{tpu_custom_call.1} parent=5 // pred_check
        _
      $region10: #{tpu_custom_call.1} parent=5 // pred_check_branch
        %123 = sbr.rel (%p120) target = $region12
      $region11: #{tpu_custom_call.1} parent=5 // pred_region
        %s124 = ssub.s32 %s16, 1
        // Predicated region
        $region13: #{tpu_custom_call.1} parent=11 // pred_check
          %p125 = pneg %p63
        $region14: #{tpu_custom_call.1} parent=11 // pred_check_branch
          %127 = sbr.rel (%p125) target = $region16
        $region15: #{tpu_custom_call.1} parent=11 // pred_region
          %129 = vsyncadd [#allocation7], 0
          %s130 = sshll.u32 %s1, 4
          %s131 = int_to_ptr.hbm [resolvable:$true] %s130
          %s132 = sshll.u32 [#allocation6], 4
          %s133 = int_to_ptr.vmem [resolvable:$true] %s132
          %138 = dma.hbm_to_vmem [thread:$0]  %s131, 1536, %s133, [#allocation7], 128, 128, 8
        $region16: #{tpu_custom_call.1} parent=11 // pred_fallthru
          _
        // Predicated region
        $region17: #{tpu_custom_call.1} parent=11 // pred_check
          %p139 = pneg %p84
        $region18: #{tpu_custom_call.1} parent=11 // pred_check_branch
          %141 = sbr.rel (%p139) target = $region20
        $region19: #{tpu_custom_call.1} parent=11 // pred_region
          %143 = vsyncadd [#allocation7], 0
          %s144 = sshll.u32 %s2, 4
          %s145 = int_to_ptr.hbm [resolvable:$true] %s144
          %s146 = sshll.u32 [#allocation8], 4
          %s147 = int_to_ptr.vmem [resolvable:$true] %s146
          %152 = dma.hbm_to_vmem [thread:$0]  %s145, 512, %s147, [#allocation7], 128, 128, 8
        $region20: #{tpu_custom_call.1} parent=11 // pred_fallthru
          _
      $region12: #{tpu_custom_call.1} parent=5 // pred_fallthru
        _
      %p153 = scmp.lt.s32.totalorder %s16, 2
      // Predicated region
      $region21: #{tpu_custom_call.1} parent=5 // pred_check
        %p154 = pneg %p153
      $region22: #{tpu_custom_call.1} parent=5 // pred_check_branch
        %156 = sbr.rel (%p154) target = $region24
      $region23: #{tpu_custom_call.1} parent=5 // pred_region
        // Predicated region
        $region25: #{tpu_custom_call.1} parent=23 // pred_check
          %p157 = pneg %p36
        $region26: #{tpu_custom_call.1} parent=23 // pred_check_branch
          %159 = sbr.rel (%p157) target = $region28
        $region27: #{tpu_custom_call.1} parent=23 // pred_region
          %s160 = sand.u32 %s26, 1
          %s161 = scalar_lea.sflag [#allocation4], %s160
          %s162 = sand.u32 %s26, 1
          %s163 = smul.addr %s162, 8
          %s164 = scalar_lea.vmem [#allocation3], %s163
          %166 = vsyncadd %s161, 0
          %s167 = smul.addr %s16, 8
          %s168 = scalar_lea.hbm %s0, %s167
          %s170 = sshll.u32 %s168, 4
          %s171 = int_to_ptr.hbm [resolvable:$true] %s170
          %s172 = sshll.u32 %s164, 4
          %s173 = int_to_ptr.vmem [resolvable:$true] %s172
          %175 = dma.hbm_to_vmem [thread:$0]  %s171, 128, %s173, %s161
        $region28: #{tpu_custom_call.1} parent=23 // pred_fallthru
          _
      $region24: #{tpu_custom_call.1} parent=5 // pred_fallthru
        _
      %p176 = scmp.le.s32.totalorder 1, %s16
      %p177 = scmp.lt.s32.totalorder %s16, 3
      %p178 = pnand %p176, %p177
      %p179 = pneg %p178
      // Predicated region
      $region29: #{tpu_custom_call.1} parent=5 // pred_check
        _
      $region30: #{tpu_custom_call.1} parent=5 // pred_check_branch
        %181 = sbr.rel (%p178) target = $region32
      $region31: #{tpu_custom_call.1} parent=5 // pred_region
        %s182 = ssub.s32 %s16, 1
        %s183 = sand.u32 %s29, 1
        %s184 = scalar_lea.sflag [#allocation4], %s183
        %s185 = sand.u32 %s29, 1
        %s186 = smul.addr %s185, 8
        %s187 = scalar_lea.vmem [#allocation3], %s186
        // Predicated region
        $region33: #{tpu_custom_call.1} parent=31 // pred_check
          %p188 = pneg %p42
        $region34: #{tpu_custom_call.1} parent=31 // pred_check_branch
          %190 = sbr.rel (%p188) target = $region36
        $region35: #{tpu_custom_call.1} parent=31 // pred_region
          %192 = dma.done %s184, 128
        $region36: #{tpu_custom_call.1} parent=31 // pred_fallthru
          _
        // Predicated region
        $region37: #{tpu_custom_call.1} parent=31 // pred_check
          %p193 = pneg %p63
        $region38: #{tpu_custom_call.1} parent=31 // pred_check_branch
          %195 = sbr.rel (%p193) target = $region40
        $region39: #{tpu_custom_call.1} parent=31 // pred_region
          %197 = dma.done [#allocation7], 1536
        $region40: #{tpu_custom_call.1} parent=31 // pred_fallthru
          _
        // Predicated region
        $region41: #{tpu_custom_call.1} parent=31 // pred_check
          %p198 = pneg %p84
        $region42: #{tpu_custom_call.1} parent=31 // pred_check_branch
          %200 = sbr.rel (%p198) target = $region44
        $region43: #{tpu_custom_call.1} parent=31 // pred_region
          %202 = dma.done [#allocation7], 512
        $region44: #{tpu_custom_call.1} parent=31 // pred_fallthru
          _
        %s203 = sand.u32 %s29, 1
        %s204 = scalar_lea.sflag [#allocation4], %s203
        %s205 = sand.u32 %s29, 1
        %s206 = smul.addr %s205, 8
        %s207 = scalar_lea.vmem [#allocation3], %s206
        %p208 = pneg %p42
        %p209 = pneg %p39
        %p210 = pneg %p63
        %p211 = pneg %p60
        %p212 = pneg %p84
        %p213 = pneg %p81
        %p214 = pneg %p110
        %p215 = pneg %p107
        %s216 = sand.u32 %s97, 1
        %s217 = scalar_lea.sflag [#allocation5], %s216
        %s218 = sand.u32 %s97, 1
        %s219 = smul.addr %s218, 8
        %s220 = scalar_lea.vmem [#allocation9], %s219
        %v221 = vld [vmem:[%s187] sm:$0xff]
        %v222 = vld [vmem:[#allocation6] sm:$0xff]
        %v223 = vld [vmem:[#allocation6 + $0x8] sm:$0xff]
        %v224 = vld [vmem:[#allocation6 + $0x10] sm:$0xff]
        %vm225 = vcmask 261120
        %v227 = vsel %vm225, %v221, 0
        %v230 = vsel %vm225, %v222, 0
        %v233 = vsel %vm225, %v223, 0
        %v236 = vsel %vm225, %v224, 0
        %238 = vmatpush.xpose.msra.mxu0 0.0
        %239 = vmatpush.xpose.msra.mxu0 0.0
        %240 = vmatpush.xpose.msra.mxu0 0.0
        %241 = vmatpush.xpose.msra.mxu0 0.0
        %242 = vmatpush.xpose.msra.mxu0 0.0
        %243 = vmatpush.xpose.msra.mxu0 0.0
        %244 = vmatpush.xpose.msra.mxu0 0.0
        %245 = vmatpush.xpose.msra.mxu0 0.0
        %246 = vmatpush.xpose.msra.mxu0 0.0
        %247 = vmatpush.xpose.msra.mxu0 0.0
        %248 = vmatpush.xpose.msra.mxu0 0.0
        %249 = vmatpush.xpose.msra.mxu0 0.0
        %250 = vmatpush.xpose.msra.mxu0 0.0
        %251 = vmatpush.xpose.msra.mxu0 %v236
        %252 = vmatpush.xpose.msra.mxu0 %v233
        %253 = vmatpush.xpose.msra.mxu0 %v230
        %254 = vmatmul.f32.gmra.mxu0 %v227
        %v255 = vpop.f32.mrf.mxu0
        %v256 = vadd.f32 0.0, %v255
        %257 = vdwg.mxu0
        %259 = vrot.lane.b32.xlu0 %v256, 120
        %v260 = vpop.permute.xlu0 %259
        %vm261 = vcmask 64512
        %v262 = vsel %vm261, %v256, 0
        %v264 = vsel %vm261, %v260, 0
        %266 = vmatpush.xpose.msra.mxu0 0.0
        %267 = vmatpush.xpose.msra.mxu0 0.0
        %268 = vmatpush.xpose.msra.mxu0 0.0
        %269 = vmatpush.xpose.msra.mxu0 0.0
        %270 = vmatpush.xpose.msra.mxu0 0.0
        %271 = vmatpush.xpose.msra.mxu0 0.0
        %272 = vmatpush.xpose.msra.mxu0 0.0
        %273 = vmatpush.xpose.msra.mxu0 0.0
        %274 = vmatpush.xpose.msra.mxu0 0.0
        %275 = vmatpush.xpose.msra.mxu0 0.0
        %276 = vmatpush.xpose.msra.mxu0 0.0
        %277 = vmatpush.xpose.msra.mxu0 0.0
        %278 = vmatpush.xpose.msra.mxu0 0.0
        %279 = vmatpush.xpose.msra.mxu0 0.0
        %280 = vmatpush.xpose.msra.mxu0 0.0
        %281 = vmatpush.xpose.msra.mxu0 %v264
        %282 = vmatmul.f32.gmra.mxu0 %v262
        %v283 = vpop.f32.mrf.mxu0
        %v284 = vadd.f32 0.0, %v283
        %285 = vdwg.mxu0
        %v286 = vsel %vm261, %v284, -inf
        %287 = vmax.xlane.f32.xlu0 %v286
        %v288 = vpop.xlane.xlu0 %287
        %v289 = vsub.f32 %v284, %v288
        %v290 = vmul.f32 %v289, 1.442695
        %v291 = vpow.pop %v290
        %v292 = vsel %vm261, %v291, 0.0
        %293 = vadd.xlane.f32.xlu0 %v292
        %v294 = vpop.xlane.xlu0 %293
        %v295 = vrcp.pop %v294
        %v296 = vmul.f32 %v294, %v295
        %v297 = vsub.f32 1.0, %v296
        %v298 = vmul.f32 %v295, %v297
        %v299 = vadd.f32 %v295, %v298
        %vm300 = vweird.f32 %v294
        %vm301 = vweird.f32 %v295
        %vm302 = vmor %vm300, %vm301
        %v303 = vsel %vm302, %v295, %v299
        %v304 = vand.u32 2147483647, %v294
        %vm305 = vcmp.eq.f32.partialorder %v304, 8.507059e+37
        %v306 = vand.u32 %v294, 2147483648
        %v307 = vor.u32 1.1754944e-38, %v306
        %v308 = vsel %vm305, %v307, %v303
        %309 = vrot.lane.b32.xlu0 %v256, 112
        %v310 = vpop.permute.xlu0 %309
        %v313 = vsel %vm261, %v291, 0
        %315 = vmatpush.msra.mxu0 0.0
        %316 = vmatpush.msra.mxu0 0.0
        %317 = vmatpush.msra.mxu0 0.0
        %318 = vmatpush.msra.mxu0 0.0
        %319 = vmatpush.msra.mxu0 0.0
        %320 = vmatpush.msra.mxu0 0.0
        %321 = vmatpush.msra.mxu0 0.0
        %322 = vmatpush.msra.mxu0 0.0
        %323 = vmatpush.msra.mxu0 0.0
        %324 = vmatpush.msra.mxu0 0.0
        %325 = vmatpush.msra.mxu0 0.0
        %326 = vmatpush.msra.mxu0 0.0
        %327 = vmatpush.msra.mxu0 0.0
        %328 = vmatpush.msra.mxu0 0.0
        %329 = vmatpush.msra.mxu0 0.0
        %330 = vmatpush.msra.mxu0 %v310
        %331 = vmatmul.f32.gmra.mxu0 %v313
        %v332 = vpop.f32.mrf.mxu0
        %v333 = vadd.f32 0.0, %v332
        %334 = vdwg.mxu0
        %v335 = vmul.f32 %v333, %v308
        %336 = vst.msk [vmem:[#allocation2] sm:$0xff] %vm261, %v335
        %s337 = scalar_lea.vmem [#allocation6], 24
        %v338 = vld [vmem:[%s337] sm:$0xff]
        %v339 = vld [vmem:[%s337 + $0x8] sm:$0xff]
        %v340 = vld [vmem:[%s337 + $0x10] sm:$0xff]
        %v342 = vsel %vm225, %v338, 0
        %v345 = vsel %vm225, %v339, 0
        %v348 = vsel %vm225, %v340, 0
        %350 = vmatpush.xpose.msra.mxu0 0.0
        %351 = vmatpush.xpose.msra.mxu0 0.0
        %352 = vmatpush.xpose.msra.mxu0 0.0
        %353 = vmatpush.xpose.msra.mxu0 0.0
        %354 = vmatpush.xpose.msra.mxu0 0.0
        %355 = vmatpush.xpose.msra.mxu0 0.0
        %356 = vmatpush.xpose.msra.mxu0 0.0
        %357 = vmatpush.xpose.msra.mxu0 0.0
        %358 = vmatpush.xpose.msra.mxu0 0.0
        %359 = vmatpush.xpose.msra.mxu0 0.0
        %360 = vmatpush.xpose.msra.mxu0 0.0
        %361 = vmatpush.xpose.msra.mxu0 0.0
        %362 = vmatpush.xpose.msra.mxu0 0.0
        %363 = vmatpush.xpose.msra.mxu0 %v348
        %364 = vmatpush.xpose.msra.mxu0 %v345
        %365 = vmatpush.xpose.msra.mxu0 %v342
        %366 = vmatmul.f32.gmra.mxu0 %v227
        %v367 = vpop.f32.mrf.mxu0
        %v368 = vadd.f32 0.0, %v367
        %369 = vdwg.mxu0
        %371 = vrot.lane.b32.xlu0 %v368, 120
        %v372 = vpop.permute.xlu0 %371
        %v373 = vsel %vm261, %v368, 0
        %v375 = vsel %vm261, %v372, 0
        %377 = vmatpush.xpose.msra.mxu0 0.0
        %378 = vmatpush.xpose.msra.mxu0 0.0
        %379 = vmatpush.xpose.msra.mxu0 0.0
        %380 = vmatpush.xpose.msra.mxu0 0.0
        %381 = vmatpush.xpose.msra.mxu0 0.0
        %382 = vmatpush.xpose.msra.mxu0 0.0
        %383 = vmatpush.xpose.msra.mxu0 0.0
        %384 = vmatpush.xpose.msra.mxu0 0.0
        %385 = vmatpush.xpose.msra.mxu0 0.0
        %386 = vmatpush.xpose.msra.mxu0 0.0
        %387 = vmatpush.xpose.msra.mxu0 0.0
        %388 = vmatpush.xpose.msra.mxu0 0.0
        %389 = vmatpush.xpose.msra.mxu0 0.0
        %390 = vmatpush.xpose.msra.mxu0 0.0
        %391 = vmatpush.xpose.msra.mxu0 0.0
        %392 = vmatpush.xpose.msra.mxu0 %v375
        %393 = vmatmul.f32.gmra.mxu0 %v373
        %v394 = vpop.f32.mrf.mxu0
        %v395 = vadd.f32 0.0, %v394
        %396 = vdwg.mxu0
        %v397 = vsel %vm261, %v395, -inf
        %398 = vmax.xlane.f32.xlu0 %v397
        %v399 = vpop.xlane.xlu0 %398
        %v400 = vsub.f32 %v395, %v399
        %v401 = vmul.f32 %v400, 1.442695
        %v402 = vpow.pop %v401
        %v403 = vsel %vm261, %v402, 0.0
        %404 = vadd.xlane.f32.xlu0 %v403
        %v405 = vpop.xlane.xlu0 %404
        %v406 = vrcp.pop %v405
        %v407 = vmul.f32 %v405, %v406
        %v408 = vsub.f32 1.0, %v407
        %v409 = vmul.f32 %v406, %v408
        %v410 = vadd.f32 %v406, %v409
        %vm411 = vweird.f32 %v405
        %vm412 = vweird.f32 %v406
        %vm413 = vmor %vm411, %vm412
        %v414 = vsel %vm413, %v406, %v410
        %v415 = vand.u32 2147483647, %v405
        %vm416 = vcmp.eq.f32.partialorder %v415, 8.507059e+37
        %v417 = vand.u32 %v405, 2147483648
        %v418 = vor.u32 1.1754944e-38, %v417
        %v419 = vsel %vm416, %v418, %v414
        %420 = vrot.lane.b32.xlu0 %v368, 112
        %v421 = vpop.permute.xlu0 %420
        %v424 = vsel %vm261, %v402, 0
        %426 = vmatpush.msra.mxu0 0.0
        %427 = vmatpush.msra.mxu0 0.0
        %428 = vmatpush.msra.mxu0 0.0
        %429 = vmatpush.msra.mxu0 0.0
        %430 = vmatpush.msra.mxu0 0.0
        %431 = vmatpush.msra.mxu0 0.0
        %432 = vmatpush.msra.mxu0 0.0
        %433 = vmatpush.msra.mxu0 0.0
        %434 = vmatpush.msra.mxu0 0.0
        %435 = vmatpush.msra.mxu0 0.0
        %436 = vmatpush.msra.mxu0 0.0
        %437 = vmatpush.msra.mxu0 0.0
        %438 = vmatpush.msra.mxu0 0.0
        %439 = vmatpush.msra.mxu0 0.0
        %440 = vmatpush.msra.mxu0 0.0
        %441 = vmatpush.msra.mxu0 %v421
        %442 = vmatmul.f32.gmra.mxu0 %v424
        %v443 = vpop.f32.mrf.mxu0
        %v444 = vadd.f32 0.0, %v443
        %445 = vdwg.mxu0
        %v446 = vmul.f32 %v444, %v419
        %448 = vrot.lane.b32.xlu0 %v446, 8
        %v449 = vpop.permute.xlu0 %448
        %vm451 = vcmask 130112
        %452 = vst.msk [vmem:[#allocation2] sm:$0xff] %vm451, %v449
        %s453 = scalar_lea.vmem [#allocation6], 48
        %v454 = vld [vmem:[%s453] sm:$0xff]
        %v455 = vld [vmem:[%s453 + $0x8] sm:$0xff]
        %v456 = vld [vmem:[%s453 + $0x10] sm:$0xff]
        %v458 = vsel %vm225, %v454, 0
        %v461 = vsel %vm225, %v455, 0
        %v464 = vsel %vm225, %v456, 0
        %466 = vmatpush.xpose.msra.mxu0 0.0
        %467 = vmatpush.xpose.msra.mxu0 0.0
        %468 = vmatpush.xpose.msra.mxu0 0.0
        %469 = vmatpush.xpose.msra.mxu0 0.0
        %470 = vmatpush.xpose.msra.mxu0 0.0
        %471 = vmatpush.xpose.msra.mxu0 0.0
        %472 = vmatpush.xpose.msra.mxu0 0.0
        %473 = vmatpush.xpose.msra.mxu0 0.0
        %474 = vmatpush.xpose.msra.mxu0 0.0
        %475 = vmatpush.xpose.msra.mxu0 0.0
        %476 = vmatpush.xpose.msra.mxu0 0.0
        %477 = vmatpush.xpose.msra.mxu0 0.0
        %478 = vmatpush.xpose.msra.mxu0 0.0
        %479 = vmatpush.xpose.msra.mxu0 %v464
        %480 = vmatpush.xpose.msra.mxu0 %v461
        %481 = vmatpush.xpose.msra.mxu0 %v458
        %482 = vmatmul.f32.gmra.mxu0 %v227
        %v483 = vpop.f32.mrf.mxu0
        %v484 = vadd.f32 0.0, %v483
        %485 = vdwg.mxu0
        %487 = vrot.lane.b32.xlu0 %v484, 120
        %v488 = vpop.permute.xlu0 %487
        %v489 = vsel %vm261, %v484, 0
        %v491 = vsel %vm261, %v488, 0
        %493 = vmatpush.xpose.msra.mxu0 0.0
        %494 = vmatpush.xpose.msra.mxu0 0.0
        %495 = vmatpush.xpose.msra.mxu0 0.0
        %496 = vmatpush.xpose.msra.mxu0 0.0
        %497 = vmatpush.xpose.msra.mxu0 0.0
        %498 = vmatpush.xpose.msra.mxu0 0.0
        %499 = vmatpush.xpose.msra.mxu0 0.0
        %500 = vmatpush.xpose.msra.mxu0 0.0
        %501 = vmatpush.xpose.msra.mxu0 0.0
        %502 = vmatpush.xpose.msra.mxu0 0.0
        %503 = vmatpush.xpose.msra.mxu0 0.0
        %504 = vmatpush.xpose.msra.mxu0 0.0
        %505 = vmatpush.xpose.msra.mxu0 0.0
        %506 = vmatpush.xpose.msra.mxu0 0.0
        %507 = vmatpush.xpose.msra.mxu0 0.0
        %508 = vmatpush.xpose.msra.mxu0 %v491
        %509 = vmatmul.f32.gmra.mxu0 %v489
        %v510 = vpop.f32.mrf.mxu0
        %v511 = vadd.f32 0.0, %v510
        %512 = vdwg.mxu0
        %v513 = vsel %vm261, %v511, -inf
        %514 = vmax.xlane.f32.xlu0 %v513
        %v515 = vpop.xlane.xlu0 %514
        %v516 = vsub.f32 %v511, %v515
        %v517 = vmul.f32 %v516, 1.442695
        %v518 = vpow.pop %v517
        %v519 = vsel %vm261, %v518, 0.0
        %520 = vadd.xlane.f32.xlu0 %v519
        %v521 = vpop.xlane.xlu0 %520
        %v522 = vrcp.pop %v521
        %v523 = vmul.f32 %v521, %v522
        %v524 = vsub.f32 1.0, %v523
        %v525 = vmul.f32 %v522, %v524
        %v526 = vadd.f32 %v522, %v525
        %vm527 = vweird.f32 %v521
        %vm528 = vweird.f32 %v522
        %vm529 = vmor %vm527, %vm528
        %v530 = vsel %vm529, %v522, %v526
        %v531 = vand.u32 2147483647, %v521
        %vm532 = vcmp.eq.f32.partialorder %v531, 8.507059e+37
        %v533 = vand.u32 %v521, 2147483648
        %v534 = vor.u32 1.1754944e-38, %v533
        %v535 = vsel %vm532, %v534, %v530
        %536 = vrot.lane.b32.xlu0 %v484, 112
        %v537 = vpop.permute.xlu0 %536
        %v540 = vsel %vm261, %v518, 0
        %542 = vmatpush.msra.mxu0 0.0
        %543 = vmatpush.msra.mxu0 0.0
        %544 = vmatpush.msra.mxu0 0.0
        %545 = vmatpush.msra.mxu0 0.0
        %546 = vmatpush.msra.mxu0 0.0
        %547 = vmatpush.msra.mxu0 0.0
        %548 = vmatpush.msra.mxu0 0.0
        %549 = vmatpush.msra.mxu0 0.0
        %550 = vmatpush.msra.mxu0 0.0
        %551 = vmatpush.msra.mxu0 0.0
        %552 = vmatpush.msra.mxu0 0.0
        %553 = vmatpush.msra.mxu0 0.0
        %554 = vmatpush.msra.mxu0 0.0
        %555 = vmatpush.msra.mxu0 0.0
        %556 = vmatpush.msra.mxu0 0.0
        %557 = vmatpush.msra.mxu0 %v537
        %558 = vmatmul.f32.gmra.mxu0 %v540
        %v559 = vpop.f32.mrf.mxu0
        %v560 = vadd.f32 0.0, %v559
        %561 = vdwg.mxu0
        %v562 = vmul.f32 %v560, %v535
        %564 = vrot.lane.b32.xlu0 %v562, 16
        %v565 = vpop.permute.xlu0 %564
        %vm567 = vcmask 195712
        %568 = vst.msk [vmem:[#allocation2] sm:$0xff] %vm567, %v565
        %s569 = scalar_lea.vmem [#allocation6], 72
        %v570 = vld [vmem:[%s569] sm:$0xff]
        %v571 = vld [vmem:[%s569 + $0x8] sm:$0xff]
        %v572 = vld [vmem:[%s569 + $0x10] sm:$0xff]
        %v574 = vsel %vm225, %v570, 0
        %v577 = vsel %vm225, %v571, 0
        %v580 = vsel %vm225, %v572, 0
        %582 = vmatpush.xpose.msra.mxu0 0.0
        %583 = vmatpush.xpose.msra.mxu0 0.0
        %584 = vmatpush.xpose.msra.mxu0 0.0
        %585 = vmatpush.xpose.msra.mxu0 0.0
        %586 = vmatpush.xpose.msra.mxu0 0.0
        %587 = vmatpush.xpose.msra.mxu0 0.0
        %588 = vmatpush.xpose.msra.mxu0 0.0
        %589 = vmatpush.xpose.msra.mxu0 0.0
        %590 = vmatpush.xpose.msra.mxu0 0.0
        %591 = vmatpush.xpose.msra.mxu0 0.0
        %592 = vmatpush.xpose.msra.mxu0 0.0
        %593 = vmatpush.xpose.msra.mxu0 0.0
        %594 = vmatpush.xpose.msra.mxu0 0.0
        %595 = vmatpush.xpose.msra.mxu0 %v580
        %596 = vmatpush.xpose.msra.mxu0 %v577
        %597 = vmatpush.xpose.msra.mxu0 %v574
        %598 = vmatmul.f32.gmra.mxu0 %v227
        %v599 = vpop.f32.mrf.mxu0
        %v600 = vadd.f32 0.0, %v599
        %601 = vdwg.mxu0
        %603 = vrot.lane.b32.xlu0 %v600, 120
        %v604 = vpop.permute.xlu0 %603
        %v605 = vsel %vm261, %v600, 0
        %v607 = vsel %vm261, %v604, 0
        %609 = vmatpush.xpose.msra.mxu0 0.0
        %610 = vmatpush.xpose.msra.mxu0 0.0
        %611 = vmatpush.xpose.msra.mxu0 0.0
        %612 = vmatpush.xpose.msra.mxu0 0.0
        %613 = vmatpush.xpose.msra.mxu0 0.0
        %614 = vmatpush.xpose.msra.mxu0 0.0
        %615 = vmatpush.xpose.msra.mxu0 0.0
        %616 = vmatpush.xpose.msra.mxu0 0.0
        %617 = vmatpush.xpose.msra.mxu0 0.0
        %618 = vmatpush.xpose.msra.mxu0 0.0
        %619 = vmatpush.xpose.msra.mxu0 0.0
        %620 = vmatpush.xpose.msra.mxu0 0.0
        %621 = vmatpush.xpose.msra.mxu0 0.0
        %622 = vmatpush.xpose.msra.mxu0 0.0
        %623 = vmatpush.xpose.msra.mxu0 0.0
        %624 = vmatpush.xpose.msra.mxu0 %v607
        %625 = vmatmul.f32.gmra.mxu0 %v605
        %v626 = vpop.f32.mrf.mxu0
        %v627 = vadd.f32 0.0, %v626
        %628 = vdwg.mxu0
        %v629 = vsel %vm261, %v627, -inf
        %630 = vmax.xlane.f32.xlu0 %v629
        %v631 = vpop.xlane.xlu0 %630
        %v632 = vsub.f32 %v627, %v631
        %v633 = vmul.f32 %v632, 1.442695
        %v634 = vpow.pop %v633
        %v635 = vsel %vm261, %v634, 0.0
        %636 = vadd.xlane.f32.xlu0 %v635
        %v637 = vpop.xlane.xlu0 %636
        %v638 = vrcp.pop %v637
        %v639 = vmul.f32 %v637, %v638
        %v640 = vsub.f32 1.0, %v639
        %v641 = vmul.f32 %v638, %v640
        %v642 = vadd.f32 %v638, %v641
        %vm643 = vweird.f32 %v637
        %vm644 = vweird.f32 %v638
        %vm645 = vmor %vm643, %vm644
        %v646 = vsel %vm645, %v638, %v642
        %v647 = vand.u32 2147483647, %v637
        %vm648 = vcmp.eq.f32.partialorder %v647, 8.507059e+37
        %v649 = vand.u32 %v637, 2147483648
        %v650 = vor.u32 1.1754944e-38, %v649
        %v651 = vsel %vm648, %v650, %v646
        %652 = vrot.lane.b32.xlu0 %v600, 112
        %v653 = vpop.permute.xlu0 %652
        %v656 = vsel %vm261, %v634, 0
        %658 = vmatpush.msra.mxu0 0.0
        %659 = vmatpush.msra.mxu0 0.0
        %660 = vmatpush.msra.mxu0 0.0
        %661 = vmatpush.msra.mxu0 0.0
        %662 = vmatpush.msra.mxu0 0.0
        %663 = vmatpush.msra.mxu0 0.0
        %664 = vmatpush.msra.mxu0 0.0
        %665 = vmatpush.msra.mxu0 0.0
        %666 = vmatpush.msra.mxu0 0.0
        %667 = vmatpush.msra.mxu0 0.0
        %668 = vmatpush.msra.mxu0 0.0
        %669 = vmatpush.msra.mxu0 0.0
        %670 = vmatpush.msra.mxu0 0.0
        %671 = vmatpush.msra.mxu0 0.0
        %672 = vmatpush.msra.mxu0 0.0
        %673 = vmatpush.msra.mxu0 %v653
        %674 = vmatmul.f32.gmra.mxu0 %v656
        %v675 = vpop.f32.mrf.mxu0
        %v676 = vadd.f32 0.0, %v675
        %677 = vdwg.mxu0
        %v678 = vmul.f32 %v676, %v651
        %680 = vrot.lane.b32.xlu0 %v678, 24
        %v681 = vpop.permute.xlu0 %680
        %vm683 = vcmask 261312
        %684 = vst.msk [vmem:[#allocation2] sm:$0xff] %vm683, %v681
        %v685 = vld [vmem:[#allocation2] sm:$0xff]
        %v686 = vld [vmem:[#allocation8] sm:$0xff]
        %v687 = vld [vmem:[#allocation8 + $0x8] sm:$0xff]
        %v688 = vld [vmem:[#allocation8 + $0x10] sm:$0xff]
        %v689 = vld [vmem:[#allocation8 + $0x18] sm:$0xff]
        %v691 = vsel %vm225, %v685, 0
        %693 = vmatpush.msra.mxu0 0.0
        %694 = vmatpush.msra.mxu0 0.0
        %695 = vmatpush.msra.mxu0 0.0
        %696 = vmatpush.msra.mxu0 0.0
        %697 = vmatpush.msra.mxu0 0.0
        %698 = vmatpush.msra.mxu0 0.0
        %699 = vmatpush.msra.mxu0 0.0
        %700 = vmatpush.msra.mxu0 0.0
        %701 = vmatpush.msra.mxu0 0.0
        %702 = vmatpush.msra.mxu0 0.0
        %703 = vmatpush.msra.mxu0 0.0
        %704 = vmatpush.msra.mxu0 0.0
        %705 = vmatpush.msra.mxu0 %v689
        %706 = vmatpush.msra.mxu0 %v688
        %707 = vmatpush.msra.mxu0 %v687
        %708 = vmatpush.msra.mxu0 %v686
        %709 = vmatmul.f32.gmra.mxu0 %v691
        %v710 = vpop.f32.mrf.mxu0
        %v711 = vadd.f32 0.0, %v710
        %712 = vdwg.mxu0
        %713 = vst.msk [vmem:[%s220] sm:$0xff] %vm225, %v711
        %s714 = sand.u32 %s97, 1
        %s715 = scalar_lea.sflag [#allocation5], %s714
        %s716 = sand.u32 %s97, 1
        %s717 = smul.addr %s716, 8
        %s718 = scalar_lea.vmem [#allocation9], %s717
        // Predicated region
        $region45: #{tpu_custom_call.1} parent=31 // pred_check
          %p719 = pneg %p107
        $region46: #{tpu_custom_call.1} parent=31 // pred_check_branch
          %721 = sbr.rel (%p719) target = $region48
        $region47: #{tpu_custom_call.1} parent=31 // pred_region
          %723 = vsyncadd %s715, 0
          %s724 = smul.addr %s21, 8
          %s725 = scalar_lea.hbm %s3, %s724
          %s727 = sshll.u32 %s718, 4
          %s728 = int_to_ptr.vmem [resolvable:$true] %s727
          %s729 = sshll.u32 %s725, 4
          %s730 = int_to_ptr.hbm [resolvable:$true] %s729
          %732 = dma.vmem_to_hbm [thread:$0]  %s728, 128, %s730, %s715
        $region48: #{tpu_custom_call.1} parent=31 // pred_fallthru
          _
      $region32: #{tpu_custom_call.1} parent=5 // pred_fallthru
        _
      %p733 = scmp.le.s32.totalorder 2, %s16
      // Predicated region
      $region49: #{tpu_custom_call.1} parent=5 // pred_check
        %p734 = pneg %p733
      $region50: #{tpu_custom_call.1} parent=5 // pred_check_branch
        %736 = sbr.rel (%p734) target = $region52
      $region51: #{tpu_custom_call.1} parent=5 // pred_region
        %s737 = ssub.s32 %s16, 2
        // Predicated region
        $region53: #{tpu_custom_call.1} parent=51 // pred_check
          %p738 = pneg %p113
        $region54: #{tpu_custom_call.1} parent=51 // pred_check_branch
          %740 = sbr.rel (%p738) target = $region56
        $region55: #{tpu_custom_call.1} parent=51 // pred_region
          %s741 = sand.u32 %s98, 1
          %s742 = scalar_lea.sflag [#allocation5], %s741
          %s743 = sand.u32 %s98, 1
          %s744 = smul.addr %s743, 8
          %s745 = scalar_lea.vmem [#allocation9], %s744
          %747 = dma.done %s742, 128
        $region56: #{tpu_custom_call.1} parent=51 // pred_fallthru
          _
      $region52: #{tpu_custom_call.1} parent=5 // pred_fallthru
        _
    $region6: #{tpu_custom_call.1} parent=1 // loop_footer
      %s20 = sadd.s32 1, %s16
    $region7: #{tpu_custom_call.1} parent=1 // loop_footer_branch
      %15 = sbr.rel target = $region3
    $region8: #{tpu_custom_call.1} parent=1 // loop_exit
      _
    %748 = vsyncpa [#allocation4], 1
    %s749 = scalar_lea.sflag [#allocation4], 1
    %750 = vsyncpa %s749, 1
    %751 = vsyncpa [#allocation7], 1
    %752 = vsyncpa [#allocation5], 1
    %s753 = scalar_lea.sflag [#allocation5], 1
    %754 = vsyncpa %s753, 1

</llo_original>
